<compile_context>
chip_gen: v7x
topology: tpu7x:2x2x1
jax: 0.10.0
libtpu: 0.0.40
codegen_flags: <defaults>
</compile_context>

<pallas_src>
import math

import jax
import jax.numpy as jnp
from jax.experimental import pallas as pl
from jax.experimental.pallas import tpu as pltpu


def _embed_pe_kernel(x_ref, w_ref, pe_ref, o_ref):
    # x:  (Bb, TS, Din)  block of Bb batch elements x TS seq rows
    # w:  (Din, Dm_p)    linear weight (resident across the grid, 1 buffer)
    # pe: (TS, Dm_p)     positional encoding + bias for this seq tile
    # o:  (Bb, TS, Dm_p)
    proj = jnp.einsum(
        "btk,kd->btd", x_ref[...], w_ref[...], preferred_element_type=jnp.float32
    )
    o_ref[...] = (proj + pe_ref[...][None, :, :]).astype(o_ref.dtype)


def sinusoidal_pos_encoding(seq_len: int, d_model: int) -> jnp.ndarray:
    """Standard transformer sinusoidal PE table of shape (seq_len, d_model).

    Handles odd d_model (cos half gets floor(d_model/2) columns).
    """
    position = jnp.arange(seq_len, dtype=jnp.float32)[:, None]
    div_term = jnp.exp(
        jnp.arange(0, d_model, 2, dtype=jnp.float32) * (-math.log(10000.0) / d_model)
    )
    sin = jnp.sin(position * div_term)  # (S, ceil(Dm/2))
    cos = jnp.cos(position * div_term)  # (S, ceil(Dm/2))
    pe = jnp.zeros((seq_len, d_model), dtype=jnp.float32)
    pe = pe.at[:, 0::2].set(sin)
    pe = pe.at[:, 1::2].set(cos[:, : d_model // 2])
    return pe


def _round_up(x: int, m: int) -> int:
    return (x + m - 1) // m * m


def input_embedding_pos_encoding(x, w, b, pe, *, ts_target: int = 512, out_dtype=None):
    """x: (B, S, Din), w: (Din, Dm), b: (Dm,), pe: (S, Dm) -> (B, S, Dm).

    out_dtype defaults to the promoted input dtype (f32 for f32 inputs, which
    matches the PyTorch module). Pass jnp.bfloat16 to halve the dominant HBM
    output stream if the consumer accepts it.
    """
    B, S, Din = x.shape
    Dm = w.shape[1]
    if out_dtype is None:
        out_dtype = jnp.result_type(x.dtype, w.dtype)
    out_dtype = jnp.dtype(out_dtype)

    # Fold bias into the PE table (one fewer input stream, one fewer VPU add).
    pe_b = pe.astype(jnp.float32) + b.astype(jnp.float32)[None, :]

    # Lane-dense output: pad d_model to a multiple of 128 only when needed.
    Dm_p = max(_round_up(Dm, 128), 128)
    if Dm_p != Dm:
        w = jnp.pad(w, ((0, 0), (0, Dm_p - Dm)))
        pe_b = jnp.pad(pe_b, ((0, 0), (0, Dm_p - Dm)))

    # Balanced seq tiling, NO host padding of x: split S into near-equal,
    # sublane-aligned tiles; Pallas clips the partial last block.
    n_seq = pl.cdiv(S, ts_target)
    TS = min(_round_up(pl.cdiv(S, n_seq), 8), _round_up(S, 8))
    # Fold batch elements into one grid step when seq tiles are small so the
    # per-step output tile stays large enough to amortize pipeline overhead.
    Bb = min(B, max(1, ts_target // TS))

    grid = (pl.cdiv(S, TS), pl.cdiv(B, Bb))  # batch innermost -> W/PE resident

    # Actual VMEM requirement (x, pe, out double-buffered; w single buffer),
    # with margin, capped well under v7x's 64 MiB physical VMEM.
    vmem_need = (
        2 * Bb * TS * Din * x.dtype.itemsize
        + Din * Dm_p * w.dtype.itemsize
        + 2 * TS * Dm_p * 4
        + 2 * Bb * TS * Dm_p * out_dtype.itemsize
    )
    vmem_limit = int(min(48 << 20, max(vmem_need + (4 << 20), 16 << 20)))

    bytes_accessed = (
        x.size * x.dtype.itemsize
        + w.size * w.dtype.itemsize
        + pe_b.size * pe_b.dtype.itemsize
        + B * S * Dm_p * out_dtype.itemsize
    )

    out = pl.pallas_call(
        _embed_pe_kernel,
        out_shape=jax.ShapeDtypeStruct((B, S, Dm_p), out_dtype),
        grid_spec=pl.GridSpec(
            grid=grid,
            in_specs=[
                # x: (Bb, TS, Din) block of batch-block bb, seq tile s.
                pl.BlockSpec((Bb, TS, Din), lambda s, bb: (bb, s, 0)),
                # w: full weight, resident, single pipeline buffer.
                pl.BlockSpec(
                    (Din, Dm_p), lambda s, bb: (0, 0), pipeline_mode=pl.Buffered(1)
                ),
                # pe(+bias): depends only on the seq tile, not on batch.
                pl.BlockSpec((TS, Dm_p), lambda s, bb: (s, 0)),
            ],
            out_specs=pl.BlockSpec((Bb, TS, Dm_p), lambda s, bb: (bb, s, 0)),
        ),
        compiler_params=pltpu.CompilerParams(
            # seq parallel (megacore split on v7x), batch-inner arbitrary so
            # PE/W tiles stay resident across the inner loop on each core.
            dimension_semantics=("parallel", "arbitrary"),
            vmem_limit_bytes=vmem_limit,
        ),
        cost_estimate=pl.CostEstimate(
            flops=2 * B * S * Din * Dm_p,
            transcendentals=0,
            bytes_accessed=bytes_accessed,
        ),
    )(x, w, pe_b)

    if Dm_p != Dm:
        out = out[..., :Dm]
    return out


if __name__ == "__main__":
    # Small shapes consistent with the module's forward.
    B, S, Din, Dm = 2, 8, 16, 32

    key = jax.random.PRNGKey(0)
    kx, kw, kb = jax.random.split(key, 3)

    x = jax.random.normal(kx, (B, S, Din), dtype=jnp.float32)

    # Deterministic nn.Linear-style init: U(-1/sqrt(Din), 1/sqrt(Din)).
    bound = 1.0 / math.sqrt(Din)
    w_t = jax.random.uniform(
        kw, (Dm, Din), minval=-bound, maxval=bound, dtype=jnp.float32
    )  # torch layout (out, in)
    b = jax.random.uniform(kb, (Dm,), minval=-bound, maxval=bound, dtype=jnp.float32)
    w = w_t.T  # (Din, Dm) for the kernel

    pe = sinusoidal_pos_encoding(S, Dm)

    out = input_embedding_pos_encoding(x, w, b, pe)
    out = jax.block_until_ready(out)

    # Pure-JAX reference check of the forward semantics.
    ref = x @ w + b[None, None, :] + pe[None, :, :]
    assert out.shape == (B, S, Dm)
    assert out.dtype == jnp.float32
    assert jnp.allclose(out, ref, atol=1e-5, rtol=1e-5)

    print("KERNEL_OK")
</pallas_src>

<mosaic_0001>
module attributes {stable_mosaic.version = 11 : i64} {
  func.func @_embed_pe_kernel(%arg0: i32, %arg1: i32, %arg2: memref<2x8x16xf32, #tpu.memory_space<vmem>>, %arg3: memref<16x128xf32, #tpu.memory_space<vmem>>, %arg4: memref<8x128xf32, #tpu.memory_space<vmem>>, %arg5: memref<2x8x128xf32, #tpu.memory_space<vmem>>) attributes {dimension_semantics = [#tpu.dimension_semantics<parallel>, #tpu.dimension_semantics<arbitrary>], iteration_bounds = array<i64: 1, 1>, scalar_prefetch = 0 : i64, scratch_operands = 0 : i64, tpu.core_type = #tpu.core_type<tc>, window_params = [{transform_indices = @transform_0, window_bounds = array<i64: 2, 8, 16>}, {pipeline_mode = #tpu.pipeline_mode<synchronous>, transform_indices = @transform_1, window_bounds = array<i64: 16, 128>}, {transform_indices = @transform_2, window_bounds = array<i64: 8, 128>}, {transform_indices = @transform_3, window_bounds = array<i64: 2, 8, 128>}]} {
    %c0 = arith.constant 0 : index
    %c0_0 = arith.constant 0 : index
    %c0_1 = arith.constant 0 : index
    %0 = vector.load %arg2[%c0, %c0_0, %c0_1] : memref<2x8x16xf32, #tpu.memory_space<vmem>>, vector<2x8x16xf32>
    %c0_2 = arith.constant 0 : index
    %c0_3 = arith.constant 0 : index
    %1 = vector.load %arg3[%c0_2, %c0_3] : memref<16x128xf32, #tpu.memory_space<vmem>>, vector<16x128xf32>
    "tpu.trace_start"() <{level = 10 : i32, message = "btk,kd->btd"}> : () -> ()
    %cst = arith.constant dense<0.000000e+00> : vector<2x8x128xf32>
    %2 = tpu.matmul %0, %1, %cst {dimension_numbers = #tpu.dot_dimension_numbers<[2], [0], [0, 1], [1], [0, 0, 0, 1, 1, 1], [], []>} : vector<2x8x16xf32>, vector<16x128xf32>, vector<2x8x128xf32> -> vector<2x8x128xf32>
    "tpu.trace_stop"() : () -> ()
    %c0_4 = arith.constant 0 : index
    %c0_5 = arith.constant 0 : index
    %3 = vector.load %arg4[%c0_4, %c0_5] : memref<8x128xf32, #tpu.memory_space<vmem>>, vector<8x128xf32>
    %4 = vector.shape_cast %3 : vector<8x128xf32> to vector<1x8x128xf32>
    %5 = vector.broadcast %4 : vector<1x8x128xf32> to vector<2x8x128xf32>
    %6 = arith.addf %2, %5 : vector<2x8x128xf32>
    %c0_6 = arith.constant 0 : index
    %c0_7 = arith.constant 0 : index
    %c0_8 = arith.constant 0 : index
    %7 = vector.load %arg5[%c0_6, %c0_7, %c0_8] : memref<2x8x128xf32, #tpu.memory_space<vmem>>, vector<2x8x128xf32>
    tpu.vector_store %arg5[%c0_6, %c0_7, %c0_8], %6 {strides = array<i32>} : memref<2x8x128xf32, #tpu.memory_space<vmem>>, vector<2x8x128xf32>,
    return
  }
  func.func @transform_0(%arg0: i32, %arg1: i32) -> (i32, i32, i32) {
    %c0_i32 = arith.constant 0 : i32
    %c0_i32_0 = arith.constant 0 : i32
    return %arg1, %arg0, %c0_i32 : i32, i32, i32
  }
  func.func @transform_1(%arg0: i32, %arg1: i32) -> (i32, i32) {
    %c0_i32 = arith.constant 0 : i32
    %c0_i32_0 = arith.constant 0 : i32
    %c0_i32_1 = arith.constant 0 : i32
    return %c0_i32, %c0_i32_0 : i32, i32
  }
  func.func @transform_2(%arg0: i32, %arg1: i32) -> (i32, i32) {
    %c0_i32 = arith.constant 0 : i32
    %c0_i32_0 = arith.constant 0 : i32
    return %arg0, %c0_i32 : i32, i32
  }
  func.func @transform_3(%arg0: i32, %arg1: i32) -> (i32, i32, i32) {
    %c0_i32 = arith.constant 0 : i32
    %c0_i32_0 = arith.constant 0 : i32
    return %arg1, %arg0, %c0_i32 : i32, i32, i32
  }
}

</mosaic_0001>

<llo_original>
// kernel: tpu_custom_call.1
$region0: #{tpu_custom_call.1}
  #allocation0 [shape = 'u32[]', space=smem, size = 0x4, offset = 0x4, fixed_abs, tag = 'smem constant byte address 0x4 - core index']
  #allocation1 [shape = 'u32[144,128]{1,0:T(1,128)}', space=vmem, size = 0x12000, scoped, tag = 'internal scratch']
  %s0 = inlined_call_operand.hbm [shape: f32[2,8,16], index: 0, kind: input, shape index: {}]
  %s1 = inlined_call_operand.hbm [shape: f32[16,128], index: 1, kind: input, shape index: {}]
  %s2 = inlined_call_operand.hbm [shape: f32[8,128], index: 2, kind: input, shape index: {}]
  %s3 = inlined_call_operand.hbm [shape: f32[2,8,128], index: 3, kind: output, shape index: {}]
  %s4 = sld [smem:[#allocation0]]
  $region34: #{tpu_custom_call.1} parent=0
    _
  %s6 = ssub.s32 1, %s4
  %s7 = scalar_select 0, %s6, %s4
  $region1: #{tpu_custom_call.1} parent=0
    #allocation2 [shape = 'u8[8192]{0}', space=vmem, size = 0x2000, scoped, tag = 'input window, operand 0, single buffered']
    #allocation3 [shape = 's32[1]{0}', space=sflag, size = 0x4, scoped, tag = 'scoped memory for tpu_custom_call.1']
    #allocation4 [shape = 's32[1]{0}', space=sflag, size = 0x4, scoped, tag = 'scoped memory for tpu_custom_call.1']
    #allocation5 [shape = 'u8[8192]{0}', space=vmem, size = 0x2000, scoped, tag = 'input window, operand 1, single buffered']
    #allocation6 [shape = 's32[1]{0}', space=sflag, size = 0x4, scoped, tag = 'scoped memory for tpu_custom_call.1']
    #allocation7 [shape = 'u8[4096]{0}', space=vmem, size = 0x1000, scoped, tag = 'input window, operand 2, single buffered']
    #allocation8 [shape = 'u8[8192]{0}', space=vmem, size = 0x2000, scoped, tag = 'output window, operand 0, single buffered']
    %8 = vsyncpa [#allocation3], 0
    %9 = vsyncpa [#allocation6], 0
    %10 = vsyncpa [#allocation4], 0
    // Predicated region
    $region2: #{tpu_custom_call.1} parent=1 // pred_check
      _
    $region3: #{tpu_custom_call.1} parent=1 // pred_check_branch
      %12 = sbr.rel (0) target = $region5
    $region4: #{tpu_custom_call.1} parent=1 // pred_region
      %s14 = ssub.s32 256, 256
      %15 = vsyncadd [#allocation3], %s14
      %s16 = sshll.u32 [#allocation2], 4
      %s17 = int_to_ptr.vmem [resolvable:$true] %s16
      %22 = dma.hbm_to_vmem [thread:$0]  %s0, 256, %s17, [#allocation3], 128, 128, 8
    $region5: #{tpu_custom_call.1} parent=1 // pred_fallthru
      _
    // Predicated region
    $region6: #{tpu_custom_call.1} parent=1 // pred_check
      _
    $region7: #{tpu_custom_call.1} parent=1 // pred_check_branch
      %24 = sbr.rel (0) target = $region9
    $region8: #{tpu_custom_call.1} parent=1 // pred_region
      %s26 = ssub.s32 256, 256
      %27 = vsyncadd [#allocation6], %s26
      %s28 = sshll.u32 [#allocation5], 4
      %s29 = int_to_ptr.vmem [resolvable:$true] %s28
      %34 = dma.hbm_to_vmem [thread:$0]  %s1, 256, %s29, [#allocation6], 128, 128, 8
    $region9: #{tpu_custom_call.1} parent=1 // pred_fallthru
      _
    // Predicated region
    $region10: #{tpu_custom_call.1} parent=1 // pred_check
      _
    $region11: #{tpu_custom_call.1} parent=1 // pred_check_branch
      %36 = sbr.rel (0) target = $region13
    $region12: #{tpu_custom_call.1} parent=1 // pred_region
      %s38 = ssub.s32 128, 128
      %39 = vsyncadd [#allocation6], %s38
      %s41 = sshll.u32 [#allocation7], 4
      %s42 = int_to_ptr.vmem [resolvable:$true] %s41
      %44 = dma.hbm_to_vmem [thread:$0]  %s2, 128, %s42, [#allocation6]
    $region13: #{tpu_custom_call.1} parent=1 // pred_fallthru
      _
    // Predicated region
    $region14: #{tpu_custom_call.1} parent=1 // pred_check
      _
    $region15: #{tpu_custom_call.1} parent=1 // pred_check_branch
      %46 = sbr.rel (0) target = $region17
    $region16: #{tpu_custom_call.1} parent=1 // pred_region
      %47 = dma.done [#allocation3], 256
    $region17: #{tpu_custom_call.1} parent=1 // pred_fallthru
      _
    // Predicated region
    $region18: #{tpu_custom_call.1} parent=1 // pred_check
      _
    $region19: #{tpu_custom_call.1} parent=1 // pred_check_branch
      %49 = sbr.rel (0) target = $region21
    $region20: #{tpu_custom_call.1} parent=1 // pred_region
      %50 = dma.done [#allocation6], 256
    $region21: #{tpu_custom_call.1} parent=1 // pred_fallthru
      _
    // Predicated region
    $region22: #{tpu_custom_call.1} parent=1 // pred_check
      _
    $region23: #{tpu_custom_call.1} parent=1 // pred_check_branch
      %52 = sbr.rel (0) target = $region25
    $region24: #{tpu_custom_call.1} parent=1 // pred_region
      %53 = dma.done [#allocation6], 128
    $region25: #{tpu_custom_call.1} parent=1 // pred_fallthru
      _
    %v54 = vld [vmem:[#allocation2] sm:$0xff]
    %v55 = vld [vmem:[#allocation2 + $0x8] sm:$0xff]
    %v56 = vld [vmem:[#allocation5] sm:$0xff]
    %v57 = vld [vmem:[#allocation5 + $0x8] sm:$0xff]
    %v58 = vld [vmem:[#allocation7] sm:$0xff]
    %vm59 = vcmask 130048
    %v61 = vsel %vm59, %v54, 0
    %v64 = vsel %vm59, %v55, 0
    %66 = vmatprep.subr.mxu0 0.0
    %67 = vmatpush1.msra.mxu0 %v56
    %68 = vmatprep.subr.mxu0 0.0
    %69 = vmatpush1.msra.mxu0 %v57
    %70 = vmatprep.subr.mxu0 0.0
    %71 = vmatpush1.msra.mxu0 0.0
    %72 = vmatprep.subr.mxu0 0.0
    %73 = vmatpush1.msra.mxu0 0.0
    %74 = vmatprep.subr.mxu0 0.0
    %75 = vmatpush1.msra.mxu0 0.0
    %76 = vmatprep.subr.mxu0 0.0
    %77 = vmatpush1.msra.mxu0 0.0
    %78 = vmatprep.subr.mxu0 0.0
    %79 = vmatpush1.msra.mxu0 0.0
    %80 = vmatprep.subr.mxu0 0.0
    %81 = vmatpush1.msra.mxu0 0.0
    %82 = vmatprep.subr.mxu0 0.0
    %83 = vmatpush1.msra.mxu0 0.0
    %84 = vmatprep.subr.mxu0 0.0
    %85 = vmatpush1.msra.mxu0 0.0
    %86 = vmatprep.subr.mxu0 0.0
    %87 = vmatpush1.msra.mxu0 0.0
    %88 = vmatprep.subr.mxu0 0.0
    %89 = vmatpush1.msra.mxu0 0.0
    %90 = vmatprep.subr.mxu0 0.0
    %91 = vmatpush1.msra.mxu0 0.0
    %92 = vmatprep.subr.mxu0 0.0
    %93 = vmatpush1.msra.mxu0 0.0
    %94 = vmatprep.subr.mxu0 0.0
    %95 = vmatpush1.msra.mxu0 0.0
    %96 = vmatprep.subr.mxu0 0.0
    %97 = vmatpush1.msra.mxu0 0.0
    %98 = vmatprep.subr.mxu0 0.0
    %99 = vmatpush1.msra.mxu0 0.0
    %100 = vmatprep.subr.mxu0 0.0
    %101 = vmatpush1.msra.mxu0 0.0
    %102 = vmatprep.subr.mxu0 0.0
    %103 = vmatpush1.msra.mxu0 0.0
    %104 = vmatprep.subr.mxu0 0.0
    %105 = vmatpush1.msra.mxu0 0.0
    %106 = vmatprep.subr.mxu0 0.0
    %107 = vmatpush1.msra.mxu0 0.0
    %108 = vmatprep.subr.mxu0 0.0
    %109 = vmatpush1.msra.mxu0 0.0
    %110 = vmatprep.subr.mxu0 0.0
    %111 = vmatpush1.msra.mxu0 0.0
    %112 = vmatprep.subr.mxu0 0.0
    %113 = vmatpush1.msra.mxu0 0.0
    %114 = vmatprep.subr.mxu0 0.0
    %115 = vmatpush1.msra.mxu0 0.0
    %116 = vmatprep.subr.mxu0 0.0
    %117 = vmatpush1.msra.mxu0 0.0
    %118 = vmatprep.subr.mxu0 0.0
    %119 = vmatpush1.msra.mxu0 0.0
    %120 = vmatprep.subr.mxu0 0.0
    %121 = vmatpush1.msra.mxu0 0.0
    %122 = vmatprep.subr.mxu0 0.0
    %123 = vmatpush1.msra.mxu0 0.0
    %124 = vmatprep.subr.mxu0 0.0
    %125 = vmatpush1.msra.mxu0 0.0
    %126 = vmatprep.subr.mxu0 0.0
    %127 = vmatpush1.msra.mxu0 0.0
    %128 = vmatprep.subr.mxu0 0.0
    %129 = vmatpush1.msra.mxu0 0.0
    %130 = vmatprep.mubr.f32.mxu0 0.0
    %131 = vmatmul.mubr.f32.gmra.mrb[0].mxu0 %v61
    %v132 = vpop.f32.mrb[0].mxu0
    %v133 = vadd.f32 %v58, %v132
    %v134 = vpop.f32.mrb[0].mxu0
    %135 = vmatprep.mubr.f32.mxu0 0.0
    %136 = vmatmul.mubr.f32.gmra.mrb[0].mxu0 %v64
    %v137 = vpop.f32.mrb[0].mxu0
    %v138 = vadd.f32 %v58, %v137
    %v139 = vpop.f32.mrb[0].mxu0
    %140 = vdwg.mxu0
    %141 = vst [vmem:[#allocation8] sm:$0xff] %v133
    %142 = vst [vmem:[#allocation8 + $0x8] sm:$0xff] %v138
    // Predicated region
    $region26: #{tpu_custom_call.1} parent=1 // pred_check
      _
    $region27: #{tpu_custom_call.1} parent=1 // pred_check_branch
      %144 = sbr.rel (0) target = $region29
    $region28: #{tpu_custom_call.1} parent=1 // pred_region
      %s146 = ssub.s32 256, 256
      %147 = vsyncadd [#allocation4], %s146
      %s148 = sshll.u32 [#allocation8], 4
      %s149 = int_to_ptr.vmem [resolvable:$true] %s148
      %154 = dma.vmem_to_hbm [thread:$0]  %s149, 256, %s3, [#allocation4], 128, 128, 8
    $region29: #{tpu_custom_call.1} parent=1 // pred_fallthru
      _
    // Predicated region
    $region30: #{tpu_custom_call.1} parent=1 // pred_check
      _
    $region31: #{tpu_custom_call.1} parent=1 // pred_check_branch
      %156 = sbr.rel (0) target = $region33
    $region32: #{tpu_custom_call.1} parent=1 // pred_region
      %157 = dma.done [#allocation4], 256
    $region33: #{tpu_custom_call.1} parent=1 // pred_fallthru
      _
    %158 = vsyncpa [#allocation3], 1
    %159 = vsyncpa [#allocation6], 1
    %160 = vsyncpa [#allocation4], 1

</llo_original>
